<compile_context>
chip_gen: v5e
topology: v5e:2x2
jax: 0.10.0
libtpu: 0.0.40
codegen_flags: <defaults>
</compile_context>

<pallas_src>
import functools
import math

import jax
import jax.numpy as jnp
from jax.experimental import pallas as pl
from jax.experimental.pallas import tpu as pltpu


def _float_biter_kernel(x_ref, o_ref, *, b):
    x = x_ref[...].astype(jnp.float32)                      # (tile_rows, 128)
    v = jnp.clip(x + 1.0, 1.0, 16.0)
    inv_log4 = jnp.float32(1.0 / math.log(4.0))
    t = jnp.log(v) * inv_log4                               # log4(clamped) in [0, 2]

    # Collapsed bit extraction: s = floor(t*2^(b-1)) mod 2^b ; q = s / 2^(b-1).
    hi = jnp.float32(2.0 ** (b - 1))
    inv_hi = jnp.float32(2.0 ** -(b - 1))
    full = jnp.float32(2.0 ** b)
    inv_full = jnp.float32(2.0 ** -b)
    s = jnp.floor(t * hi)                                   # floor == trunc (t >= 0)
    s = s - full * jnp.floor(s * inv_full)                  # s mod 2^b, exact in f32
    q = s * inv_hi

    y = jnp.exp(q * jnp.float32(math.log(4.0))) - 1.0       # 4**q - 1
    o_ref[...] = y.astype(o_ref.dtype)


def float_biter_forward(x, b, *, max_block_rows=4096):
    """Pallas implementation of FloatBiter.forward (value == to_float(to_bit(x)))."""
    orig_shape = x.shape
    dtype = x.dtype
    lane, sub = 128, 8

    n = math.prod(orig_shape)
    rows_needed = pl.cdiv(n, lane)
    rows_aligned = max(sub, ((rows_needed + sub - 1) // sub) * sub)

    # Balanced tiles (avoid over-padding when rows slightly exceed the cap);
    # keep >= 2 tiles for large inputs so v7x's 2 TensorCores both get work.
    min_tiles = 2 if rows_aligned >= 1024 else 1
    num_tiles = max(min_tiles, pl.cdiv(rows_aligned, max_block_rows))
    tile_rows = ((pl.cdiv(rows_aligned, num_tiles) + sub - 1) // sub) * sub
    rows = num_tiles * tile_rows
    total = rows * lane

    flat = jnp.ravel(x)
    if total != n:
        flat = jnp.pad(flat, (0, total - n))                # pad 0 -> y(0)=0, sliced away
    x2 = flat.reshape(rows, lane)

    kernel = functools.partial(_float_biter_kernel, b=b)
    out = pl.pallas_call(
        kernel,
        out_shape=jax.ShapeDtypeStruct((rows, lane), dtype),
        grid_spec=pltpu.PrefetchScalarGridSpec(
            num_scalar_prefetch=0,
            grid=(num_tiles,),
            in_specs=[pl.BlockSpec((tile_rows, lane), lambda i: (i, 0))],
            out_specs=pl.BlockSpec((tile_rows, lane), lambda i: (i, 0)),
        ),
        compiler_params=pltpu.CompilerParams(
            dimension_semantics=("parallel",)),
    )(x2)

    if total != n:
        out = out.reshape(-1)[:n]
    return out.reshape(orig_shape)


def _reference(x, b):
    """Pure-JAX reference mirroring the PyTorch module (per-bit formulation)."""
    dot_base = (2.0 ** jnp.arange(b)).astype(jnp.float32)        # (b,)
    v = jnp.clip(x + 1.0, 1.0, 16.0)[..., None]
    t = jnp.log(v) / math.log(4.0)
    bits = (t * dot_base).astype(jnp.int32) % 2                  # .long() % 2
    q = jnp.sum(bits.astype(jnp.float32) / dot_base, axis=-1)
    return jnp.power(4.0, q) - 1.0


if __name__ == "__main__":
    b = 4
    shape = (2, 4, 16, 16)

    key = jax.random.PRNGKey(0)
    x = jax.random.uniform(key, shape, minval=-0.5, maxval=16.0, dtype=jnp.float32)

    out = float_biter_forward(x, b)
    out = jax.block_until_ready(out)
    ref = _reference(x, b)

    assert out.shape == shape
    assert out.dtype == x.dtype

    # Elements whose log4 value sits within a few ULPs of a quantization-bit
    # boundary can legitimately flip a bit between the Mosaic (kernel) and XLA
    # (reference) log implementations; exclude only those from the strict check.
    t = jnp.log(jnp.clip(x + 1.0, 1.0, 16.0)) / math.log(4.0)
    fine = t * (2.0 ** (b - 1))
    boundary_dist = jnp.abs(fine - jnp.round(fine))
    safe = boundary_dist > 1e-5
    close = jnp.isclose(out, ref, atol=1e-4, rtol=1e-4)

    assert float(jnp.mean(safe.astype(jnp.float32))) > 0.5        # check is not vacuous
    assert bool(jnp.all(jnp.logical_or(close, jnp.logical_not(safe))))

    print("KERNEL_OK")
</pallas_src>

<mosaic_0001>
module attributes {stable_mosaic.version = 11 : i64} {
  func.func @_float_biter_kernel(%arg0: i32, %arg1: memref<16x128xf32, #tpu.memory_space<vmem>>, %arg2: memref<16x128xf32, #tpu.memory_space<vmem>>) attributes {dimension_semantics = [#tpu.dimension_semantics<parallel>], iteration_bounds = array<i64: 1>, scalar_prefetch = 0 : i64, scratch_operands = 0 : i64, tpu.core_type = #tpu.core_type<tc>, window_params = [{transform_indices = @transform_0, window_bounds = array<i64: 16, 128>}, {transform_indices = @transform_1, window_bounds = array<i64: 16, 128>}]} {
    %c0 = arith.constant 0 : index
    %c0_0 = arith.constant 0 : index
    %0 = vector.load %arg1[%c0, %c0_0] : memref<16x128xf32, #tpu.memory_space<vmem>>, vector<16x128xf32>
    %cst = arith.constant 1.000000e+00 : f32
    %1 = vector.broadcast %cst : f32 to vector<16x128xf32>
    %2 = arith.addf %0, %1 : vector<16x128xf32>
    %cst_1 = arith.constant 1.000000e+00 : f32
    %cst_2 = arith.constant 1.600000e+01 : f32
    %3 = vector.broadcast %cst_1 : f32 to vector<16x128xf32>
    %4 = arith.maximumf %3, %2 : vector<16x128xf32>
    %5 = vector.broadcast %cst_2 : f32 to vector<16x128xf32>
    %6 = arith.minimumf %5, %4 : vector<16x128xf32>
    %7 = math.log %6 : vector<16x128xf32>
    %cst_3 = arith.constant 0.72134751 : f32
    %8 = vector.broadcast %cst_3 : f32 to vector<16x128xf32>
    %9 = arith.mulf %7, %8 : vector<16x128xf32>
    %cst_4 = arith.constant 8.000000e+00 : f32
    %10 = vector.broadcast %cst_4 : f32 to vector<16x128xf32>
    %11 = arith.mulf %9, %10 : vector<16x128xf32>
    %12 = math.floor %11 : vector<16x128xf32>
    %cst_5 = arith.constant 6.250000e-02 : f32
    %13 = vector.broadcast %cst_5 : f32 to vector<16x128xf32>
    %14 = arith.mulf %12, %13 : vector<16x128xf32>
    %15 = math.floor %14 : vector<16x128xf32>
    %cst_6 = arith.constant 1.600000e+01 : f32
    %16 = vector.broadcast %cst_6 : f32 to vector<16x128xf32>
    %17 = arith.mulf %16, %15 : vector<16x128xf32>
    %18 = arith.subf %12, %17 : vector<16x128xf32>
    %cst_7 = arith.constant 1.250000e-01 : f32
    %19 = vector.broadcast %cst_7 : f32 to vector<16x128xf32>
    %20 = arith.mulf %18, %19 : vector<16x128xf32>
    %cst_8 = arith.constant 1.38629436 : f32
    %21 = vector.broadcast %cst_8 : f32 to vector<16x128xf32>
    %22 = arith.mulf %20, %21 : vector<16x128xf32>
    %23 = math.exp %22 : vector<16x128xf32>
    %cst_9 = arith.constant 1.000000e+00 : f32
    %24 = vector.broadcast %cst_9 : f32 to vector<16x128xf32>
    %25 = arith.subf %23, %24 : vector<16x128xf32>
    %c0_10 = arith.constant 0 : index
    %c0_11 = arith.constant 0 : index
    %26 = vector.load %arg2[%c0_10, %c0_11] : memref<16x128xf32, #tpu.memory_space<vmem>>, vector<16x128xf32>
    tpu.vector_store %arg2[%c0_10, %c0_11], %25 {strides = array<i32>} : memref<16x128xf32, #tpu.memory_space<vmem>>, vector<16x128xf32>,
    return
  }
  func.func @transform_0(%arg0: i32) -> (i32, i32) {
    %c0_i32 = arith.constant 0 : i32
    %c0_i32_0 = arith.constant 0 : i32
    return %arg0, %c0_i32 : i32, i32
  }
  func.func @transform_1(%arg0: i32) -> (i32, i32) {
    %c0_i32 = arith.constant 0 : i32
    %c0_i32_0 = arith.constant 0 : i32
    return %arg0, %c0_i32 : i32, i32
  }
}

</mosaic_0001>

<llo_original>
// kernel: tpu_custom_call.1
$region0: #{tpu_custom_call.1}
  #allocation0 [shape = 'u32[]', space=smem, size = 0x4, offset = 0x4, fixed_abs, tag = 'smem constant byte address 0x4 - core index']
  #allocation1 [shape = 'u32[72,128]{1,0:T(1,128)}', space=vmem, size = 0x9000, scoped, tag = 'internal scratch']
  %s0 = inlined_call_operand.hbm [shape: f32[16,128], index: 0, kind: input, shape index: {}]
  %s1 = inlined_call_operand.hbm [shape: f32[16,128], index: 1, kind: output, shape index: {}]
  %s2 = sld [smem:[#allocation0]]
  $region18: #{tpu_custom_call.1} parent=0
    _
  %s4 = ssub.s32 1, %s2
  %s5 = scalar_select 0, %s4, %s2
  $region1: #{tpu_custom_call.1} parent=0
    #allocation2 [shape = 'u8[8192]{0}', space=vmem, size = 0x2000, scoped, tag = 'input window, operand 0, single buffered']
    #allocation3 [shape = 's32[1]{0}', space=sflag, size = 0x4, scoped, tag = 'scoped memory for tpu_custom_call.1']
    #allocation4 [shape = 's32[1]{0}', space=sflag, size = 0x4, scoped, tag = 'scoped memory for tpu_custom_call.1']
    #allocation5 [shape = 'u8[8192]{0}', space=vmem, size = 0x2000, scoped, tag = 'output window, operand 0, single buffered']
    %6 = vsyncpa [#allocation3], 0
    %7 = vsyncpa [#allocation4], 0
    // Predicated region
    $region2: #{tpu_custom_call.1} parent=1 // pred_check
      _
    $region3: #{tpu_custom_call.1} parent=1 // pred_check_branch
      %9 = sbr.rel (0) target = $region5
    $region4: #{tpu_custom_call.1} parent=1 // pred_region
      %11 = vsyncadd [#allocation3], 0
      %s12 = sshll.u32 %s0, 4
      %s13 = int_to_ptr.hbm [resolvable:$true] %s12
      %s14 = sshll.u32 [#allocation2], 4
      %s15 = int_to_ptr.vmem [resolvable:$true] %s14
      %20 = dma.hbm_to_vmem [thread:$0]  %s13, 256, %s15, [#allocation3], 128, 128, 8
    $region5: #{tpu_custom_call.1} parent=1 // pred_fallthru
      _
    // Predicated region
    $region6: #{tpu_custom_call.1} parent=1 // pred_check
      _
    $region7: #{tpu_custom_call.1} parent=1 // pred_check_branch
      %22 = sbr.rel (0) target = $region9
    $region8: #{tpu_custom_call.1} parent=1 // pred_region
      %24 = dma.done [#allocation3], 256
    $region9: #{tpu_custom_call.1} parent=1 // pred_fallthru
      _
    %v25 = vld [vmem:[#allocation2] sm:$0xff]
    %v26 = vld [vmem:[#allocation2 + $0x8] sm:$0xff]
    %v27 = vadd.f32 %v25, 1.0
    %v28 = vadd.f32 %v26, 1.0
    %v29 = vmax.f32 %v27, 1.0
    %v30 = vmax.f32 %v28, 1.0
    %v31 = vmin.f32 %v29, 16.0
    %v32 = vmin.f32 %v30, 16.0
    %v33 = vlog2.pop %v31
    %v34 = vmul.f32 %v33, 0.6931472
    %v35 = vlog2.pop %v32
    %v36 = vmul.f32 %v35, 0.6931472
    %v37 = vmul.f32 %v34, 0.7213475
    %v38 = vmul.f32 %v36, 0.7213475
    %v39 = vmul.f32 %v37, 8.0
    %v40 = vmul.f32 %v38, 8.0
    %v41 = vfloor.f32 %v39
    %v42 = vfloor.f32 %v40
    %v43 = vmul.f32 %v41, 0.0625
    %v44 = vmul.f32 %v42, 0.0625
    %v45 = vfloor.f32 %v43
    %v46 = vfloor.f32 %v44
    %v47 = vmul.f32 %v45, 16.0
    %v48 = vmul.f32 %v46, 16.0
    %v49 = vsub.f32 %v41, %v47
    %v50 = vsub.f32 %v42, %v48
    %v51 = vmul.f32 %v49, 0.125
    %v52 = vmul.f32 %v50, 0.125
    %v53 = vmul.f32 %v51, 1.3862944
    %v54 = vmul.f32 %v52, 1.3862944
    %v55 = vmul.f32 %v53, 1.442695
    %v56 = vpow.pop %v55
    %v57 = vmul.f32 %v54, 1.442695
    %v58 = vpow.pop %v57
    %v59 = vsub.f32 %v56, 1.0
    %v60 = vsub.f32 %v58, 1.0
    %61 = vst [vmem:[#allocation5] sm:$0xff] %v59
    %62 = vst [vmem:[#allocation5 + $0x8] sm:$0xff] %v60
    // Predicated region
    $region10: #{tpu_custom_call.1} parent=1 // pred_check
      _
    $region11: #{tpu_custom_call.1} parent=1 // pred_check_branch
      %64 = sbr.rel (0) target = $region13
    $region12: #{tpu_custom_call.1} parent=1 // pred_region
      %66 = vsyncadd [#allocation4], 0
      %s67 = sshll.u32 [#allocation5], 4
      %s68 = int_to_ptr.vmem [resolvable:$true] %s67
      %s69 = sshll.u32 %s1, 4
      %s70 = int_to_ptr.hbm [resolvable:$true] %s69
      %75 = dma.vmem_to_hbm [thread:$0]  %s68, 256, %s70, [#allocation4], 128, 128, 8
    $region13: #{tpu_custom_call.1} parent=1 // pred_fallthru
      _
    // Predicated region
    $region14: #{tpu_custom_call.1} parent=1 // pred_check
      _
    $region15: #{tpu_custom_call.1} parent=1 // pred_check_branch
      %77 = sbr.rel (0) target = $region17
    $region16: #{tpu_custom_call.1} parent=1 // pred_region
      %79 = dma.done [#allocation4], 256
    $region17: #{tpu_custom_call.1} parent=1 // pred_fallthru
      _
    %80 = vsyncpa [#allocation3], 1
    %81 = vsyncpa [#allocation4], 1

</llo_original>
